<compile_context>
chip_gen: v5e
topology: v5e:2x2
jax: 0.10.0
libtpu: 0.0.40
codegen_flags: <defaults>
</compile_context>

<pallas_src>
import jax
import jax.numpy as jnp
from jax.experimental import pallas as pl
from jax.experimental.pallas import tpu as pltpu


def _classification_kernel(x_ref, w1_ref, b1_ref, w2_ref, b2_ref, o_ref):
    # fc1: [TB, D_in] @ [D_in, D_red]  (MXU, f32 accumulate)
    h = jnp.dot(x_ref[...], w1_ref[...], preferred_element_type=jnp.float32)
    # bias add (VPU) + tanh (EUP slot — effectively free next to the dots)
    h = jnp.tanh(h + b1_ref[...])
    # fc2: [TB, D_red] @ [D_red, C] + bias
    y = jnp.dot(h, w2_ref[...], preferred_element_type=jnp.float32)
    o_ref[...] = (y + b2_ref[...]).astype(o_ref.dtype)


def _round_up(v, m):
    return ((v + m - 1) // m) * m


def classification_forward(x, w1, b1, w2, b2, *, block_b=1024):
    """x: [B, input_dim]; w1: [input_dim, reduced_dim]; b1: [reduced_dim];
    w2: [reduced_dim, num_classes]; b2: [num_classes]."""
    B, D_in = x.shape
    D_red = w1.shape[1]
    C = w2.shape[1]
    dt_bytes = 4  # f32 end-to-end

    # ---- Batch tile selection -------------------------------------------
    # Big tiles amortize the ~0.35us per-grid-step overhead, but keep at
    # least 2 blocks (when the batch permits) so v7x megacore shards them.
    n_blocks = pl.cdiv(B, block_b)
    if n_blocks < 2 and B >= 16:
        n_blocks = 2
    TB = max(8, _round_up(pl.cdiv(B, n_blocks), 8))

    # ---- VMEM budget: double-buffered x/out blocks + resident weights ----
    def footprint(tb):
        return (2 * tb * D_in + 2 * tb * C          # double-buffered x / out
                + D_in * D_red + D_red * C          # resident weights
                + D_red + C) * dt_bytes             # resident biases
    VMEM_BUDGET = 24 << 20  # headroom under the 32 MiB scoped default (v7x)
    while TB > 8 and footprint(TB) > VMEM_BUDGET:
        TB = max(8, _round_up(TB // 2, 8))

    grid = (pl.cdiv(B, TB),)

    # Biases as (1, N) rows so they live in VMEM with a lane-major layout.
    b1_2d = b1.reshape(1, D_red)
    b2_2d = b2.reshape(1, C)

    cost = pl.CostEstimate(
        flops=2 * B * (D_in * D_red + D_red * C),
        transcendentals=B * D_red,
        bytes_accessed=dt_bytes * (B * D_in + B * C
                                   + D_in * D_red + D_red * C + D_red + C),
    )

    return pl.pallas_call(
        _classification_kernel,
        out_shape=jax.ShapeDtypeStruct((B, C), x.dtype),
        grid=grid,
        in_specs=[
            pl.BlockSpec((TB, D_in), lambda i: (i, 0)),      # streamed input
            pl.BlockSpec((D_in, D_red), lambda i: (0, 0)),   # resident weight
            pl.BlockSpec((1, D_red), lambda i: (0, 0)),      # resident bias
            pl.BlockSpec((D_red, C), lambda i: (0, 0)),      # resident weight
            pl.BlockSpec((1, C), lambda i: (0, 0)),          # resident bias
        ],
        out_specs=pl.BlockSpec((TB, C), lambda i: (i, 0)),
        compiler_params=pltpu.CompilerParams(
            # Batch blocks are independent -> megacore-shard on v7x.
            dimension_semantics=("parallel",)),
        cost_estimate=cost,
    )(x, w1, b1_2d, w2, b2_2d)


def _reference(x, w1, b1, w2, b2):
    return jnp.tanh(x @ w1 + b1) @ w2 + b2


if __name__ == "__main__":
    # Shapes consistent with the module: input_dim=32, reduced_dim=16,
    # num_classes=4.  B=100 exercises the ragged last block; B=128 exercises
    # the evenly-divisible 2-block path.
    D_IN, D_RED, NUM_CLASSES = 32, 16, 4

    key = jax.random.PRNGKey(0)
    k_x, k_w1, k_b1, k_w2, k_b2 = jax.random.split(key, 5)

    # Init mimicking nn.Linear's uniform(-1/sqrt(fan_in), 1/sqrt(fan_in)).
    lim1 = 1.0 / (D_IN ** 0.5)
    lim2 = 1.0 / (D_RED ** 0.5)
    # Stored already transposed w.r.t. PyTorch's (out, in) layout.
    w1 = jax.random.uniform(k_w1, (D_IN, D_RED), jnp.float32, -lim1, lim1)
    b1 = jax.random.uniform(k_b1, (D_RED,), jnp.float32, -lim1, lim1)
    w2 = jax.random.uniform(k_w2, (D_RED, NUM_CLASSES), jnp.float32, -lim2, lim2)
    b2 = jax.random.uniform(k_b2, (NUM_CLASSES,), jnp.float32, -lim2, lim2)

    ok = True
    for B in (100, 128):
        x = jax.random.normal(jax.random.fold_in(k_x, B), (B, D_IN),
                              dtype=jnp.float32)
        out = classification_forward(x, w1, b1, w2, b2)
        out = jax.block_until_ready(out)
        ref = _reference(x, w1, b1, w2, b2)
        ok &= out.shape == (B, NUM_CLASSES)
        ok &= bool(jnp.allclose(out, ref, atol=1e-5, rtol=1e-5))

    assert ok, "mismatch vs reference"
    print("KERNEL_OK")
</pallas_src>

<mosaic_0001>
module attributes {stable_mosaic.version = 11 : i64} {
  func.func @_classification_kernel(%arg0: i32, %arg1: memref<56x32xf32, #tpu.memory_space<vmem>>, %arg2: memref<32x16xf32, #tpu.memory_space<vmem>>, %arg3: memref<1x16xf32, #tpu.memory_space<vmem>>, %arg4: memref<16x4xf32, #tpu.memory_space<vmem>>, %arg5: memref<1x4xf32, #tpu.memory_space<vmem>>, %arg6: memref<56x4xf32, #tpu.memory_space<vmem>>) attributes {dimension_semantics = [#tpu.dimension_semantics<parallel>], iteration_bounds = array<i64: 2>, scalar_prefetch = 0 : i64, scratch_operands = 0 : i64, tpu.core_type = #tpu.core_type<tc>, window_params = [{transform_indices = @transform_0, window_bounds = array<i64: 56, 32>}, {pipeline_mode = #tpu.pipeline_mode<synchronous>, transform_indices = @transform_1, window_bounds = array<i64: 32, 16>}, {pipeline_mode = #tpu.pipeline_mode<synchronous>, transform_indices = @transform_2, window_bounds = array<i64: 1, 16>}, {pipeline_mode = #tpu.pipeline_mode<synchronous>, transform_indices = @transform_3, window_bounds = array<i64: 16, 4>}, {pipeline_mode = #tpu.pipeline_mode<synchronous>, transform_indices = @transform_4, window_bounds = array<i64: 1, 4>}, {transform_indices = @transform_5, window_bounds = array<i64: 56, 4>}]} {
    %c0 = arith.constant 0 : index
    %c0_0 = arith.constant 0 : index
    %0 = vector.load %arg1[%c0, %c0_0] : memref<56x32xf32, #tpu.memory_space<vmem>>, vector<56x32xf32>
    %c0_1 = arith.constant 0 : index
    %c0_2 = arith.constant 0 : index
    %1 = vector.load %arg2[%c0_1, %c0_2] : memref<32x16xf32, #tpu.memory_space<vmem>>, vector<32x16xf32>
    %cst = arith.constant dense<0.000000e+00> : vector<56x16xf32>
    %2 = tpu.matmul %0, %1, %cst {dimension_numbers = #tpu.dot_dimension_numbers<[1], [0], [0], [1], [0, 0, 1, 1], [], []>} : vector<56x32xf32>, vector<32x16xf32>, vector<56x16xf32> -> vector<56x16xf32>
    %c0_3 = arith.constant 0 : index
    %c0_4 = arith.constant 0 : index
    %3 = vector.load %arg3[%c0_3, %c0_4] : memref<1x16xf32, #tpu.memory_space<vmem>>, vector<1x16xf32>
    %4 = vector.broadcast %3 : vector<1x16xf32> to vector<56x16xf32>
    %5 = arith.addf %2, %4 : vector<56x16xf32>
    %6 = math.tanh %5 : vector<56x16xf32>
    %c0_5 = arith.constant 0 : index
    %c0_6 = arith.constant 0 : index
    %7 = vector.load %arg4[%c0_5, %c0_6] : memref<16x4xf32, #tpu.memory_space<vmem>>, vector<16x4xf32>
    %cst_7 = arith.constant dense<0.000000e+00> : vector<56x4xf32>
    %8 = tpu.matmul %6, %7, %cst_7 {dimension_numbers = #tpu.dot_dimension_numbers<[1], [0], [0], [1], [0, 0, 1, 1], [], []>} : vector<56x16xf32>, vector<16x4xf32>, vector<56x4xf32> -> vector<56x4xf32>
    %c0_8 = arith.constant 0 : index
    %c0_9 = arith.constant 0 : index
    %9 = vector.load %arg5[%c0_8, %c0_9] : memref<1x4xf32, #tpu.memory_space<vmem>>, vector<1x4xf32>
    %10 = vector.broadcast %9 : vector<1x4xf32> to vector<56x4xf32>
    %11 = arith.addf %8, %10 : vector<56x4xf32>
    %c0_10 = arith.constant 0 : index
    %c0_11 = arith.constant 0 : index
    %12 = vector.load %arg6[%c0_10, %c0_11] : memref<56x4xf32, #tpu.memory_space<vmem>>, vector<56x4xf32>
    tpu.vector_store %arg6[%c0_10, %c0_11], %11 {strides = array<i32>} : memref<56x4xf32, #tpu.memory_space<vmem>>, vector<56x4xf32>,
    return
  }
  func.func @transform_0(%arg0: i32) -> (i32, i32) {
    %c0_i32 = arith.constant 0 : i32
    %c0_i32_0 = arith.constant 0 : i32
    return %arg0, %c0_i32 : i32, i32
  }
  func.func @transform_1(%arg0: i32) -> (i32, i32) {
    %c0_i32 = arith.constant 0 : i32
    %c0_i32_0 = arith.constant 0 : i32
    %c0_i32_1 = arith.constant 0 : i32
    return %c0_i32, %c0_i32_0 : i32, i32
  }
  func.func @transform_2(%arg0: i32) -> (i32, i32) {
    %c0_i32 = arith.constant 0 : i32
    %c0_i32_0 = arith.constant 0 : i32
    %c0_i32_1 = arith.constant 0 : i32
    return %c0_i32, %c0_i32_0 : i32, i32
  }
  func.func @transform_3(%arg0: i32) -> (i32, i32) {
    %c0_i32 = arith.constant 0 : i32
    %c0_i32_0 = arith.constant 0 : i32
    %c0_i32_1 = arith.constant 0 : i32
    return %c0_i32, %c0_i32_0 : i32, i32
  }
  func.func @transform_4(%arg0: i32) -> (i32, i32) {
    %c0_i32 = arith.constant 0 : i32
    %c0_i32_0 = arith.constant 0 : i32
    %c0_i32_1 = arith.constant 0 : i32
    return %c0_i32, %c0_i32_0 : i32, i32
  }
  func.func @transform_5(%arg0: i32) -> (i32, i32) {
    %c0_i32 = arith.constant 0 : i32
    %c0_i32_0 = arith.constant 0 : i32
    return %arg0, %c0_i32 : i32, i32
  }
}

</mosaic_0001>

<llo_original>
// kernel: tpu_custom_call.1
$region0: #{tpu_custom_call.1}
  #allocation0 [shape = 'u32[]', space=smem, size = 0x4, offset = 0x4, fixed_abs, tag = 'smem constant byte address 0x4 - core index']
  #allocation1 [shape = 'u32[72,128]{1,0:T(1,128)}', space=vmem, size = 0x9000, scoped, tag = 'internal scratch']
  %s0 = inlined_call_operand.vmem [shape: f32[100,32], index: 0, kind: input, shape index: {}]
  %s1 = inlined_call_operand.vmem [shape: f32[32,16], index: 1, kind: input, shape index: {}]
  %s2 = inlined_call_operand.vmem [shape: f32[1,16], index: 2, kind: input, shape index: {}]
  %s3 = inlined_call_operand.vmem [shape: f32[16,4], index: 3, kind: input, shape index: {}]
  %s4 = inlined_call_operand.vmem [shape: f32[1,4], index: 4, kind: input, shape index: {}]
  %s5 = inlined_call_operand.vmem [shape: f32[100,4], index: 5, kind: output, shape index: {}]
  %s6 = sld [smem:[#allocation0]]
  $region101: #{tpu_custom_call.1} parent=0
    _
  %s8 = ssub.s32 1, %s6
  %s9 = scalar_select 0, %s8, %s6
  $region1: #{tpu_custom_call.1} parent=0
    #allocation2 [shape = 'u8[57344]{0}', space=vmem, size = 0xe000, scoped, tag = 'output window, operand 0']
    loop: start=0, step=1, limit=4
    $region2: #{tpu_custom_call.1} parent=1 // loop_pre_header
      _
    $region3: #{tpu_custom_call.1} parent=1 // loop_header
      %s11 = sphi 0, %s15
      %p12 = scmp.ge.s32.totalorder %s11, 4
      %s21 = sphi 0, %s23
      %s24 = sphi 0, %s21
      %s25 = sphi 0, %s24
      %s41 = sphi 0, %s25
      %s45 = sphi 0, %s45
      %s47 = sphi 0, %s45
      %s48 = sphi 0, %s47
      %s62 = sphi 0, %s48
      %s66 = sphi 0, %s66
      %s68 = sphi 0, %s66
      %s69 = sphi 0, %s68
      %s83 = sphi 0, %s69
      %s87 = sphi 0, %s87
      %s89 = sphi 0, %s87
      %s90 = sphi 0, %s89
      %s104 = sphi 0, %s90
      %s108 = sphi 0, %s108
      %s110 = sphi 0, %s108
      %s111 = sphi 0, %s110
      %s125 = sphi 0, %s111
      %s131 = sphi 0, %s133
      %s134 = sphi 0, %s131
      %s135 = sphi 0, %s134
      %s151 = sphi 0, %s135
    $region4: #{tpu_custom_call.1} parent=1 // loop_header_branch
      %14 = sbr.rel (%p12) target = $region8
    $region5: #{tpu_custom_call.1} parent=1 // loop_body
      %s16 = ssub.s32 %s11, 1
      %s17 = ssub.s32 %s11, 2
      %s18 = sadd.s32 %s11, 1
      %s19 = ssub.s32 %s11, %s18
      %p20 = scmp.eq.s32.totalorder %s19, 0
      %s22 = sadd.s32 %s21, 1
      %s23 = scalar_select %p20, %s21, %s22
      %p26 = pneg %p20
      %p27 = scmp.eq.s32.totalorder %s11, 1
      %p28 = por %p26, %p27
      %p29 = scmp.ne.s32.totalorder %s21, %s24
      %p30 = scmp.eq.s32.totalorder %s11, 0
      %p31 = por %p29, %p30
      %p32 = scmp.ne.s32.totalorder %s21, %s24
      %p33 = scmp.eq.s32.totalorder %s16, 1
      %p34 = por %p32, %p33
      %p35 = scmp.ne.s32.totalorder %s24, %s25
      %p36 = scmp.eq.s32.totalorder %s16, 0
      %p37 = por %p35, %p36
      %p38 = scmp.ne.s32.totalorder %s24, %s25
      %p39 = scmp.eq.s32.totalorder %s17, 1
      %p40 = por %p38, %p39
      %p42 = scmp.ne.s32.totalorder %s25, %s41
      %p43 = scmp.eq.s32.totalorder %s17, 0
      %p44 = por %p42, %p43
      %s46 = sadd.s32 %s45, 1
      %p49 = scmp.eq.s32.totalorder %s11, 1
      %p50 = scmp.ne.s32.totalorder %s45, %s47
      %p51 = scmp.eq.s32.totalorder %s11, 0
      %p52 = por %p50, %p51
      %p53 = scmp.ne.s32.totalorder %s45, %s47
      %p54 = scmp.eq.s32.totalorder %s16, 1
      %p55 = por %p53, %p54
      %p56 = scmp.ne.s32.totalorder %s47, %s48
      %p57 = scmp.eq.s32.totalorder %s16, 0
      %p58 = por %p56, %p57
      %p59 = scmp.ne.s32.totalorder %s47, %s48
      %p60 = scmp.eq.s32.totalorder %s17, 1
      %p61 = por %p59, %p60
      %p63 = scmp.ne.s32.totalorder %s48, %s62
      %p64 = scmp.eq.s32.totalorder %s17, 0
      %p65 = por %p63, %p64
      %s67 = sadd.s32 %s66, 1
      %p70 = scmp.eq.s32.totalorder %s11, 1
      %p71 = scmp.ne.s32.totalorder %s66, %s68
      %p72 = scmp.eq.s32.totalorder %s11, 0
      %p73 = por %p71, %p72
      %p74 = scmp.ne.s32.totalorder %s66, %s68
      %p75 = scmp.eq.s32.totalorder %s16, 1
      %p76 = por %p74, %p75
      %p77 = scmp.ne.s32.totalorder %s68, %s69
      %p78 = scmp.eq.s32.totalorder %s16, 0
      %p79 = por %p77, %p78
      %p80 = scmp.ne.s32.totalorder %s68, %s69
      %p81 = scmp.eq.s32.totalorder %s17, 1
      %p82 = por %p80, %p81
      %p84 = scmp.ne.s32.totalorder %s69, %s83
      %p85 = scmp.eq.s32.totalorder %s17, 0
      %p86 = por %p84, %p85
      %s88 = sadd.s32 %s87, 1
      %p91 = scmp.eq.s32.totalorder %s11, 1
      %p92 = scmp.ne.s32.totalorder %s87, %s89
      %p93 = scmp.eq.s32.totalorder %s11, 0
      %p94 = por %p92, %p93
      %p95 = scmp.ne.s32.totalorder %s87, %s89
      %p96 = scmp.eq.s32.totalorder %s16, 1
      %p97 = por %p95, %p96
      %p98 = scmp.ne.s32.totalorder %s89, %s90
      %p99 = scmp.eq.s32.totalorder %s16, 0
      %p100 = por %p98, %p99
      %p101 = scmp.ne.s32.totalorder %s89, %s90
      %p102 = scmp.eq.s32.totalorder %s17, 1
      %p103 = por %p101, %p102
      %p105 = scmp.ne.s32.totalorder %s90, %s104
      %p106 = scmp.eq.s32.totalorder %s17, 0
      %p107 = por %p105, %p106
      %s109 = sadd.s32 %s108, 1
      %p112 = scmp.eq.s32.totalorder %s11, 1
      %p113 = scmp.ne.s32.totalorder %s108, %s110
      %p114 = scmp.eq.s32.totalorder %s11, 0
      %p115 = por %p113, %p114
      %p116 = scmp.ne.s32.totalorder %s108, %s110
      %p117 = scmp.eq.s32.totalorder %s16, 1
      %p118 = por %p116, %p117
      %p119 = scmp.ne.s32.totalorder %s110, %s111
      %p120 = scmp.eq.s32.totalorder %s16, 0
      %p121 = por %p119, %p120
      %p122 = scmp.ne.s32.totalorder %s110, %s111
      %p123 = scmp.eq.s32.totalorder %s17, 1
      %p124 = por %p122, %p123
      %p126 = scmp.ne.s32.totalorder %s111, %s125
      %p127 = scmp.eq.s32.totalorder %s17, 0
      %p128 = por %p126, %p127
      %s129 = ssub.s32 %s11, %s18
      %p130 = scmp.eq.s32.totalorder %s129, 0
      %s132 = sadd.s32 %s131, 1
      %s133 = scalar_select %p130, %s131, %s132
      %p136 = pneg %p130
      %p137 = scmp.eq.s32.totalorder %s11, 1
      %p138 = por %p136, %p137
      %p139 = scmp.ne.s32.totalorder %s131, %s134
      %p140 = scmp.eq.s32.totalorder %s11, 0
      %p141 = por %p139, %p140
      %p142 = scmp.ne.s32.totalorder %s131, %s134
      %p143 = scmp.eq.s32.totalorder %s16, 1
      %p144 = por %p142, %p143
      %p145 = scmp.ne.s32.totalorder %s134, %s135
      %p146 = scmp.eq.s32.totalorder %s16, 0
      %p147 = por %p145, %p146
      %p148 = scmp.ne.s32.totalorder %s134, %s135
      %p149 = scmp.eq.s32.totalorder %s17, 1
      %p150 = por %p148, %p149
      %p152 = scmp.ne.s32.totalorder %s135, %s151
      %p153 = scmp.eq.s32.totalorder %s17, 0
      %p154 = por %p152, %p153
      %p155 = scmp.le.s32.totalorder 1, %s11
      %p156 = scmp.lt.s32.totalorder %s11, 3
      %p157 = pnand %p155, %p156
      %p158 = pneg %p157
      // Predicated region
      $region9: #{tpu_custom_call.1} parent=5 // pred_check
        _
      $region10: #{tpu_custom_call.1} parent=5 // pred_check_branch
        %160 = sbr.rel (%p157) target = $region12
      $region11: #{tpu_custom_call.1} parent=5 // pred_region
        %s161 = ssub.s32 %s11, 1
        // Predicated region
        $region13: #{tpu_custom_call.1} parent=11 // pred_check
          %p162 = pneg %p58
        $region14: #{tpu_custom_call.1} parent=11 // pred_check_branch
          %164 = sbr.rel (%p162) target = $region16
        $region15: #{tpu_custom_call.1} parent=11 // pred_region
          _
        $region16: #{tpu_custom_call.1} parent=11 // pred_fallthru
          _
        // Predicated region
        $region17: #{tpu_custom_call.1} parent=11 // pred_check
          %p165 = pneg %p79
        $region18: #{tpu_custom_call.1} parent=11 // pred_check_branch
          %167 = sbr.rel (%p165) target = $region20
        $region19: #{tpu_custom_call.1} parent=11 // pred_region
          _
        $region20: #{tpu_custom_call.1} parent=11 // pred_fallthru
          _
        // Predicated region
        $region21: #{tpu_custom_call.1} parent=11 // pred_check
          %p168 = pneg %p100
        $region22: #{tpu_custom_call.1} parent=11 // pred_check_branch
          %170 = sbr.rel (%p168) target = $region24
        $region23: #{tpu_custom_call.1} parent=11 // pred_region
          _
        $region24: #{tpu_custom_call.1} parent=11 // pred_fallthru
          _
        // Predicated region
        $region25: #{tpu_custom_call.1} parent=11 // pred_check
          %p171 = pneg %p121
        $region26: #{tpu_custom_call.1} parent=11 // pred_check_branch
          %173 = sbr.rel (%p171) target = $region28
        $region27: #{tpu_custom_call.1} parent=11 // pred_region
          _
        $region28: #{tpu_custom_call.1} parent=11 // pred_fallthru
          _
      $region12: #{tpu_custom_call.1} parent=5 // pred_fallthru
        _
      %p174 = scmp.lt.s32.totalorder %s11, 2
      // Predicated region
      $region29: #{tpu_custom_call.1} parent=5 // pred_check
        %p175 = pneg %p174
      $region30: #{tpu_custom_call.1} parent=5 // pred_check_branch
        %177 = sbr.rel (%p175) target = $region32
      $region31: #{tpu_custom_call.1} parent=5 // pred_region
        // Predicated region
        $region33: #{tpu_custom_call.1} parent=31 // pred_check
          %p178 = pneg %p31
        $region34: #{tpu_custom_call.1} parent=31 // pred_check_branch
          %180 = sbr.rel (%p178) target = $region36
        $region35: #{tpu_custom_call.1} parent=31 // pred_region
          %s181 = smul.u32 7, %s11
          %s182 = ssub.s32 13, %s181
          %p183 = scmp.lt.s32.totalorder %s182, 7
          %s184 = scalar_select %p183, %s182, 7
          %s185 = smul.u32 8, %s184
          %p186 = scmp.lt.s32.totalorder %s181, 12
          %s187 = scalar_select %p186, %s181, 12
          %s188 = smul.addr %s187, 8
          %s189 = scalar_lea.vmem %s0, %s188
          %s190 = smul.u32 7, %s11
          %s191 = ssub.s32 13, %s190
          %p192 = scmp.lt.s32.totalorder %s191, 7
          %s193 = scalar_select %p192, %s191, 7
          %s194 = smul.u32 8, %s193
        $region36: #{tpu_custom_call.1} parent=31 // pred_fallthru
          _
      $region32: #{tpu_custom_call.1} parent=5 // pred_fallthru
        _
      %p195 = scmp.le.s32.totalorder 1, %s11
      %p196 = scmp.lt.s32.totalorder %s11, 3
      %p197 = pnand %p195, %p196
      %p198 = pneg %p197
      // Predicated region
      $region37: #{tpu_custom_call.1} parent=5 // pred_check
        _
      $region38: #{tpu_custom_call.1} parent=5 // pred_check_branch
        %200 = sbr.rel (%p197) target = $region40
      $region39: #{tpu_custom_call.1} parent=5 // pred_region
        %s201 = ssub.s32 %s11, 1
        %s202 = smul.u32 7, %s16
        %s203 = ssub.s32 13, %s202
        %p204 = scmp.lt.s32.totalorder %s203, 7
        %s205 = scalar_select %p204, %s203, 7
        %s206 = smul.u32 8, %s205
        %p207 = scmp.lt.s32.totalorder %s202, 12
        %s208 = scalar_select %p207, %s202, 12
        %s209 = smul.addr %s208, 8
        %s210 = scalar_lea.vmem %s0, %s209
        %p211 = pneg %p37
        %p212 = pneg %p34
        %p213 = pneg %p58
        %p214 = pneg %p55
        %p215 = pneg %p79
        %p216 = pneg %p76
        %p217 = pneg %p100
        %p218 = pneg %p97
        %p219 = pneg %p121
        %p220 = pneg %p118
        %p221 = pneg %p147
        %p222 = pneg %p144
        %s223 = sand.u32 %s134, 1
        %s224 = sand.u32 %s134, 1
        %s225 = smul.addr %s224, 56
        %s226 = scalar_lea.vmem [#allocation2], %s225
        %s227 = smul.u32 7, %s16
        %s228 = ssub.s32 13, %s227
        %p229 = scmp.lt.s32.totalorder %s228, 7
        %s230 = scalar_select %p229, %s228, 7
        %s231 = smul.u32 8, %s230
        %p232 = scmp.lt.s32.totalorder %s227, 12
        %s233 = scalar_select %p232, %s227, 12
        %s234 = smul.addr %s233, 8
        %s235 = scalar_lea.vmem %s0, %s234
        %s236 = smul.u32 7, %s16
        %s237 = ssub.s32 13, %s236
        %p238 = scmp.lt.s32.totalorder %s237, 7
        %s239 = scalar_select %p238, %s237, 7
        %s240 = smul.u32 8, %s239
        %s241 = smul.u32 7, %s16
        %s242 = ssub.s32 13, %s241
        %p243 = scmp.lt.s32.totalorder %s242, 7
        %s244 = scalar_select %p243, %s242, 7
        %s245 = smul.u32 8, %s244
        %v246 = vld [vmem:[%s235] sm:$0xff]
        %v247 = vld [vmem:[%s235 + $0x8] sm:$0xff]
        %v248 = vld [vmem:[%s235 + $0x10] sm:$0xff]
        %v249 = vld [vmem:[%s235 + $0x18] sm:$0xff]
        %v250 = vld [vmem:[%s235 + $0x20] sm:$0xff]
        %v251 = vld [vmem:[%s235 + $0x28] sm:$0xff]
        %v252 = vld [vmem:[%s235 + $0x30] sm:$0xff]
        %v253 = vld [vmem:[%s1] sm:$0xff]
        %v254 = vld [vmem:[%s1 + $0x8] sm:$0xff]
        %v255 = vld [vmem:[%s1 + $0x10] sm:$0xff]
        %v256 = vld [vmem:[%s1 + $0x18] sm:$0xff]
        %v257 = vld [vmem:[%s2] sm:$0x1]
        %v259 = vperm.slane %v257, 0
        %vm261 = vcmask 261120
        %v263 = vsel %vm261, %v246, 0
        %v266 = vsel %vm261, %v247, 0
        %v269 = vsel %vm261, %v248, 0
        %v272 = vsel %vm261, %v249, 0
        %v275 = vsel %vm261, %v250, 0
        %v278 = vsel %vm261, %v251, 0
        %v281 = vsel %vm261, %v252, 0
        %283 = vmatpush.msra.mxu0 0.0
        %284 = vmatpush.msra.mxu0 0.0
        %285 = vmatpush.msra.mxu0 0.0
        %286 = vmatpush.msra.mxu0 0.0
        %287 = vmatpush.msra.mxu0 0.0
        %288 = vmatpush.msra.mxu0 0.0
        %289 = vmatpush.msra.mxu0 0.0
        %290 = vmatpush.msra.mxu0 0.0
        %291 = vmatpush.msra.mxu0 0.0
        %292 = vmatpush.msra.mxu0 0.0
        %293 = vmatpush.msra.mxu0 0.0
        %294 = vmatpush.msra.mxu0 0.0
        %295 = vmatpush.msra.mxu0 %v256
        %296 = vmatpush.msra.mxu0 %v255
        %297 = vmatpush.msra.mxu0 %v254
        %298 = vmatpush.msra.mxu0 %v253
        %299 = vmatmul.f32.gmra.mxu0 %v263
        %v300 = vpop.f32.mrf.mxu0
        %v301 = vadd.f32 %v259, %v300
        %302 = vmatmul.f32.gmra.mxu0 %v266
        %v303 = vpop.f32.mrf.mxu0
        %v304 = vadd.f32 %v259, %v303
        %305 = vmatmul.f32.gmra.mxu0 %v269
        %v306 = vpop.f32.mrf.mxu0
        %v307 = vadd.f32 %v259, %v306
        %308 = vmatmul.f32.gmra.mxu0 %v272
        %v309 = vpop.f32.mrf.mxu0
        %v310 = vadd.f32 %v259, %v309
        %311 = vmatmul.f32.gmra.mxu0 %v275
        %v312 = vpop.f32.mrf.mxu0
        %v313 = vadd.f32 %v259, %v312
        %314 = vmatmul.f32.gmra.mxu0 %v278
        %v315 = vpop.f32.mrf.mxu0
        %v316 = vadd.f32 %v259, %v315
        %317 = vmatmul.f32.gmra.mxu0 %v281
        %v318 = vpop.f32.mrf.mxu0
        %v319 = vadd.f32 %v259, %v318
        %320 = vdwg.mxu0
        %v321 = vtanh.pop %v301
        %v322 = vtanh.pop %v304
        %v323 = vtanh.pop %v307
        %v324 = vtanh.pop %v310
        %v325 = vtanh.pop %v313
        %v326 = vtanh.pop %v316
        %v327 = vtanh.pop %v319
        %v328 = vld [vmem:[%s3] sm:$0xff]
        %v329 = vld [vmem:[%s3 + $0x8] sm:$0xff]
        %v330 = vld [vmem:[%s4] sm:$0x1]
        %v332 = vperm.slane %v330, 0
        %vm334 = vcmask 130048
        %v336 = vsel %vm334, %v321, 0
        %v339 = vsel %vm334, %v322, 0
        %v342 = vsel %vm334, %v323, 0
        %v345 = vsel %vm334, %v324, 0
        %v348 = vsel %vm334, %v325, 0
        %v351 = vsel %vm334, %v326, 0
        %v354 = vsel %vm334, %v327, 0
        %356 = vmatpush.msra.mxu0 0.0
        %357 = vmatpush.msra.mxu0 0.0
        %358 = vmatpush.msra.mxu0 0.0
        %359 = vmatpush.msra.mxu0 0.0
        %360 = vmatpush.msra.mxu0 0.0
        %361 = vmatpush.msra.mxu0 0.0
        %362 = vmatpush.msra.mxu0 0.0
        %363 = vmatpush.msra.mxu0 0.0
        %364 = vmatpush.msra.mxu0 0.0
        %365 = vmatpush.msra.mxu0 0.0
        %366 = vmatpush.msra.mxu0 0.0
        %367 = vmatpush.msra.mxu0 0.0
        %368 = vmatpush.msra.mxu0 0.0
        %369 = vmatpush.msra.mxu0 0.0
        %370 = vmatpush.msra.mxu0 %v329
        %371 = vmatpush.msra.mxu0 %v328
        %372 = vmatmul.f32.gmra.mxu0 %v336
        %v373 = vpop.f32.mrf.mxu0
        %v374 = vadd.f32 %v332, %v373
        %375 = vmatmul.f32.gmra.mxu0 %v339
        %v376 = vpop.f32.mrf.mxu0
        %v377 = vadd.f32 %v332, %v376
        %378 = vmatmul.f32.gmra.mxu0 %v342
        %v379 = vpop.f32.mrf.mxu0
        %v380 = vadd.f32 %v332, %v379
        %381 = vmatmul.f32.gmra.mxu0 %v345
        %v382 = vpop.f32.mrf.mxu0
        %v383 = vadd.f32 %v332, %v382
        %384 = vmatmul.f32.gmra.mxu0 %v348
        %v385 = vpop.f32.mrf.mxu0
        %v386 = vadd.f32 %v332, %v385
        %387 = vmatmul.f32.gmra.mxu0 %v351
        %v388 = vpop.f32.mrf.mxu0
        %v389 = vadd.f32 %v332, %v388
        %390 = vmatmul.f32.gmra.mxu0 %v354
        %v391 = vpop.f32.mrf.mxu0
        %v392 = vadd.f32 %v332, %v391
        %393 = vdwg.mxu0
        %vm394 = vcmask 31744
        %395 = vst.msk [vmem:[%s226] sm:$0xff] %vm394, %v374
        %396 = vst.msk [vmem:[%s226 + $0x8] sm:$0xff] %vm394, %v377
        %397 = vst.msk [vmem:[%s226 + $0x10] sm:$0xff] %vm394, %v380
        %398 = vst.msk [vmem:[%s226 + $0x18] sm:$0xff] %vm394, %v383
        %399 = vst.msk [vmem:[%s226 + $0x20] sm:$0xff] %vm394, %v386
        %400 = vst.msk [vmem:[%s226 + $0x28] sm:$0xff] %vm394, %v389
        %401 = vst.msk [vmem:[%s226 + $0x30] sm:$0xff] %vm394, %v392
        %s402 = sand.u32 %s134, 1
        %s403 = sand.u32 %s134, 1
        %s404 = smul.addr %s403, 56
        %s405 = scalar_lea.vmem [#allocation2], %s404
        // Predicated region
        $region41: #{tpu_custom_call.1} parent=39 // pred_check
          %p406 = pneg %p144
        $region42: #{tpu_custom_call.1} parent=39 // pred_check_branch
          %408 = sbr.rel (%p406) target = $region44
        $region43: #{tpu_custom_call.1} parent=39 // pred_region
          %s409 = smul.u32 7, %s16
          %s410 = ssub.s32 13, %s409
          %p411 = scmp.lt.s32.totalorder %s410, 7
          %s412 = scalar_select %p411, %s410, 7
          %s413 = smul.u32 8, %s412
          %p414 = scmp.ne.s32.totalorder 0, %s413
          %s415 = smul.addr %s409, 8
          %s416 = scalar_lea.vmem %s5, %s415
          // Predicated region
          $region45: #{tpu_custom_call.1} parent=43 // pred_check
            %p417 = pneg %p414
          $region46: #{tpu_custom_call.1} parent=43 // pred_check_branch
            %419 = sbr.rel (%p417) target = $region48
          $region47: #{tpu_custom_call.1} parent=43 // pred_region
            // Predicated region
            $region49: #{tpu_custom_call.1} parent=47 // pred_check
              _
            $region50: #{tpu_custom_call.1} parent=47 // pred_check_branch
              %421 = sbr.rel (0) target = $region52
            $region51: #{tpu_custom_call.1} parent=47 // pred_region
              // Predicated region
              $region71: #{tpu_custom_call.1} parent=51 // pred_check
                _
              $region72: #{tpu_custom_call.1} parent=51 // pred_check_branch
                %484 = sbr.rel (0) target = $region74
              $region73: #{tpu_custom_call.1} parent=51 // pred_region
                %s485 = sdiv.u32.pop %s412, 7
                %s486 = srem.u32.pop %s412, 7
                // While loop
                $region75: #{tpu_custom_call.1} parent=73 // loop_pre_header
                  _
                $region76: #{tpu_custom_call.1} parent=73 // loop_header
                  %s488 = sphi 0, %s490
                  %p489 = scmp.ge.s32.totalorder %s488, %s485
                  %s493 = sphi 0, %s512
                  %s494 = sphi %s405, %s515
                  %s495 = sphi %s416, %s516
                $region77: #{tpu_custom_call.1} parent=73 // loop_header_branch
                  %492 = sbr.rel (%p489) target = $region81
                $region78: #{tpu_custom_call.1} parent=73 // loop_body
                  %v496 = vld [vmem:[%s494] sm:$0xff]
                  %497 = vst [vmem:[%s495] sm:$0xff] %v496
                  %v498 = vld [vmem:[%s494 + $0x8] sm:$0xff]
                  %499 = vst [vmem:[%s495 + $0x8] sm:$0xff] %v498
                  %v500 = vld [vmem:[%s494 + $0x10] sm:$0xff]
                  %501 = vst [vmem:[%s495 + $0x10] sm:$0xff] %v500
                  %v502 = vld [vmem:[%s494 + $0x18] sm:$0xff]
                  %503 = vst [vmem:[%s495 + $0x18] sm:$0xff] %v502
                  %v504 = vld [vmem:[%s494 + $0x20] sm:$0xff]
                  %505 = vst [vmem:[%s495 + $0x20] sm:$0xff] %v504
                  %v506 = vld [vmem:[%s494 + $0x28] sm:$0xff]
                  %507 = vst [vmem:[%s495 + $0x28] sm:$0xff] %v506
                  %v508 = vld [vmem:[%s494 + $0x30] sm:$0xff]
                  %509 = vst [vmem:[%s495 + $0x30] sm:$0xff] %v508
                  %s510 = sadd.s32 1, %s493
                  %p511 = scmp.ge.s32.totalorder %s510, %s485
                  %s512 = scalar_select %p511, 0, %s510
                  %s513 = smul.u32 %s512, 56
                  %s514 = smul.u32 %s512, 56
                  %s515 = scalar_lea.vmem %s405, %s513 [#allocation2]
                  %s516 = scalar_lea.vmem %s416, %s514
                $region79: #{tpu_custom_call.1} parent=73 // loop_footer
                  %s490 = sadd.s32 %s488, 1
                $region80: #{tpu_custom_call.1} parent=73 // loop_footer_branch
                  %487 = sbr.rel target = $region76
                $region81: #{tpu_custom_call.1} parent=73 // loop_exit
                  _
                %s517 = sdiv.u32.pop %s412, 7
                %s518 = srem.u32.pop %s412, 7
                %s519 = smul.u32 %s517, 7
                %s520 = smul.u32 8, %s519
                %s521 = scalar_lea.vmem %s405, %s520 [#allocation2]
                %s522 = smul.u32 8, %s519
                %s523 = scalar_lea.vmem %s416, %s522
                // While loop
                $region82: #{tpu_custom_call.1} parent=73 // loop_pre_header
                  _
                $region83: #{tpu_custom_call.1} parent=73 // loop_header
                  %s525 = sphi 0, %s527
                  %p526 = scmp.ge.s32.totalorder %s525, %s518
                  %s530 = sphi 0, %s537
                  %s531 = sphi %s521, %s540
                  %s532 = sphi %s523, %s541
                $region84: #{tpu_custom_call.1} parent=73 // loop_header_branch
                  %529 = sbr.rel (%p526) target = $region88
                $region85: #{tpu_custom_call.1} parent=73 // loop_body
                  %v533 = vld [vmem:[%s531] sm:$0xff]
                  %534 = vst [vmem:[%s532] sm:$0xff] %v533
                  %s535 = sadd.s32 1, %s530
                  %p536 = scmp.ge.s32.totalorder %s535, %s518
                  %s537 = scalar_select %p536, 0, %s535
                  %s538 = smul.u32 %s537, 8
                  %s539 = smul.u32 %s537, 8
                  %s540 = scalar_lea.vmem %s521, %s538 [#allocation2]
                  %s541 = scalar_lea.vmem %s523, %s539
                $region86: #{tpu_custom_call.1} parent=73 // loop_footer
                  %s527 = sadd.s32 %s525, 1
                $region87: #{tpu_custom_call.1} parent=73 // loop_footer_branch
                  %524 = sbr.rel target = $region83
                $region88: #{tpu_custom_call.1} parent=73 // loop_exit
                  _
              $region74: #{tpu_custom_call.1} parent=51 // pred_fallthru
                _
              // Predicated region
              $region89: #{tpu_custom_call.1} parent=51 // pred_check
                _
              $region90: #{tpu_custom_call.1} parent=51 // pred_check_branch
                %543 = sbr.rel target = $region92
              $region91: #{tpu_custom_call.1} parent=51 // pred_region
                _
              $region92: #{tpu_custom_call.1} parent=51 // pred_fallthru
                _
            $region52: #{tpu_custom_call.1} parent=47 // pred_fallthru
              _
            // Predicated region
            $region53: #{tpu_custom_call.1} parent=47 // pred_check
              _
            $region54: #{tpu_custom_call.1} parent=47 // pred_check_branch
              %423 = sbr.rel target = $region56
            $region55: #{tpu_custom_call.1} parent=47 // pred_region
              %s425 = ssub.s32 256, 1
              %s426 = sdiv.u32.pop %s412, 7
              %s427 = srem.u32.pop %s412, 7
              // While loop
              $region57: #{tpu_custom_call.1} parent=55 // loop_pre_header
                _
              $region58: #{tpu_custom_call.1} parent=55 // loop_header
                %s429 = sphi 0, %s431
                %p430 = scmp.ge.s32.totalorder %s429, %s426
                %s434 = sphi 0, %s453
                %s435 = sphi %s405, %s456
                %s436 = sphi %s416, %s457
              $region59: #{tpu_custom_call.1} parent=55 // loop_header_branch
                %433 = sbr.rel (%p430) target = $region63
              $region60: #{tpu_custom_call.1} parent=55 // loop_body
                %v437 = vld [vmem:[%s435] sm:%s425]
                %438 = vst [vmem:[%s436] sm:%s425] %v437
                %v439 = vld [vmem:[%s435 + $0x8] sm:%s425]
                %440 = vst [vmem:[%s436 + $0x8] sm:%s425] %v439
                %v441 = vld [vmem:[%s435 + $0x10] sm:%s425]
                %442 = vst [vmem:[%s436 + $0x10] sm:%s425] %v441
                %v443 = vld [vmem:[%s435 + $0x18] sm:%s425]
                %444 = vst [vmem:[%s436 + $0x18] sm:%s425] %v443
                %v445 = vld [vmem:[%s435 + $0x20] sm:%s425]
                %446 = vst [vmem:[%s436 + $0x20] sm:%s425] %v445
                %v447 = vld [vmem:[%s435 + $0x28] sm:%s425]
                %448 = vst [vmem:[%s436 + $0x28] sm:%s425] %v447
                %v449 = vld [vmem:[%s435 + $0x30] sm:%s425]
                %450 = vst [vmem:[%s436 + $0x30] sm:%s425] %v449
                %s451 = sadd.s32 1, %s434
                %p452 = scmp.ge.s32.totalorder %s451, %s426
                %s453 = scalar_select %p452, 0, %s451
                %s454 = smul.u32 %s453, 56
                %s455 = smul.u32 %s453, 56
                %s456 = scalar_lea.vmem %s405, %s454 [#allocation2]
                %s457 = scalar_lea.vmem %s416, %s455
              $region61: #{tpu_custom_call.1} parent=55 // loop_footer
                %s431 = sadd.s32 %s429, 1
              $region62: #{tpu_custom_call.1} parent=55 // loop_footer_branch
                %428 = sbr.rel target = $region58
              $region63: #{tpu_custom_call.1} parent=55 // loop_exit
                _
              %s458 = sdiv.u32.pop %s412, 7
              %s459 = srem.u32.pop %s412, 7
              %s460 = smul.u32 %s458, 7
              %s461 = smul.u32 8, %s460
              %s462 = scalar_lea.vmem %s405, %s461 [#allocation2]
              %s463 = smul.u32 8, %s460
              %s464 = scalar_lea.vmem %s416, %s463
              // While loop
              $region64: #{tpu_custom_call.1} parent=55 // loop_pre_header
                _
              $region65: #{tpu_custom_call.1} parent=55 // loop_header
                %s466 = sphi 0, %s468
                %p467 = scmp.ge.s32.totalorder %s466, %s459
                %s471 = sphi 0, %s478
                %s472 = sphi %s462, %s481
                %s473 = sphi %s464, %s482
              $region66: #{tpu_custom_call.1} parent=55 // loop_header_branch
                %470 = sbr.rel (%p467) target = $region70
              $region67: #{tpu_custom_call.1} parent=55 // loop_body
                %v474 = vld [vmem:[%s472] sm:%s425]
                %475 = vst [vmem:[%s473] sm:%s425] %v474
                %s476 = sadd.s32 1, %s471
                %p477 = scmp.ge.s32.totalorder %s476, %s459
                %s478 = scalar_select %p477, 0, %s476
                %s479 = smul.u32 %s478, 8
                %s480 = smul.u32 %s478, 8
                %s481 = scalar_lea.vmem %s462, %s479 [#allocation2]
                %s482 = scalar_lea.vmem %s464, %s480
              $region68: #{tpu_custom_call.1} parent=55 // loop_footer
                %s468 = sadd.s32 %s466, 1
              $region69: #{tpu_custom_call.1} parent=55 // loop_footer_branch
                %465 = sbr.rel target = $region65
              $region70: #{tpu_custom_call.1} parent=55 // loop_exit
                _
            $region56: #{tpu_custom_call.1} parent=47 // pred_fallthru
              _
          $region48: #{tpu_custom_call.1} parent=43 // pred_fallthru
            _
          %544 = vnop
        $region44: #{tpu_custom_call.1} parent=39 // pred_fallthru
          _
      $region40: #{tpu_custom_call.1} parent=5 // pred_fallthru
        _
      %p545 = scmp.le.s32.totalorder 2, %s11
      // Predicated region
      $region93: #{tpu_custom_call.1} parent=5 // pred_check
        %p546 = pneg %p545
      $region94: #{tpu_custom_call.1} parent=5 // pred_check_branch
        %548 = sbr.rel (%p546) target = $region96
      $region95: #{tpu_custom_call.1} parent=5 // pred_region
        %s549 = ssub.s32 %s11, 2
        // Predicated region
        $region97: #{tpu_custom_call.1} parent=95 // pred_check
          %p550 = pneg %p150
        $region98: #{tpu_custom_call.1} parent=95 // pred_check_branch
          %552 = sbr.rel (%p550) target = $region100
        $region99: #{tpu_custom_call.1} parent=95 // pred_region
          %s553 = sand.u32 %s135, 1
          %s554 = sand.u32 %s135, 1
          %s555 = smul.addr %s554, 56
          %s556 = scalar_lea.vmem [#allocation2], %s555
        $region100: #{tpu_custom_call.1} parent=95 // pred_fallthru
          _
      $region96: #{tpu_custom_call.1} parent=5 // pred_fallthru
        _
    $region6: #{tpu_custom_call.1} parent=1 // loop_footer
      %s15 = sadd.s32 1, %s11
    $region7: #{tpu_custom_call.1} parent=1 // loop_footer_branch
      %10 = sbr.rel target = $region3
    $region8: #{tpu_custom_call.1} parent=1 // loop_exit
      _

</llo_original>
